<compile_context>
chip_gen: v7x
topology: tpu7x:2x2x1
jax: 0.10.0
libtpu: 0.0.40
codegen_flags: <defaults>
</compile_context>

<pallas_src>
import math

import jax
import jax.numpy as jnp
from jax.experimental import pallas as pl
from jax.experimental.pallas import tpu as pltpu

LANE = 128
SUBLANE = 8


def _round_up(a, b):
    return ((a + b - 1) // b) * b


def pack_params(w1, b1, w2, b2):
    """Pack the 13 MLP scalars into one (13,) f32 vector (do this ONCE per model).

    Layout: [0:6] w1 stored (in=2, out=3) row-major, [6:9] b1, [9:12] w2, [12] b2.
    w1/w2 are stored (in, out), i.e. transposed relative to torch's (out, in).
    """
    return jnp.concatenate(
        [jnp.ravel(w1), jnp.ravel(b1), jnp.ravel(w2), jnp.ravel(b2)]
    ).astype(jnp.float32)


def or_mlp_kernel(params_ref, x_ref, o_ref):
    """One batch tile of the OR MLP, pure VPU/EUP.

    params_ref : SMEM (13,) f32 (scalar-prefetched)
    x_ref      : VMEM (2, br, 128) -- feature-major, batch on (sublane, lane)
    o_ref      : VMEM (br, 128)
    """
    x0 = x_ref[0]  # feature 0, (br, 128)
    x1 = x_ref[1]  # feature 1, (br, 128)

    out = None
    for j in range(3):  # unrolled over the 3 hidden units
        h = x0 * params_ref[j] + x1 * params_ref[3 + j] + params_ref[6 + j]
        # sigmoid as a single EUP transcendental: 0.5*tanh(0.5*h) + 0.5
        h = 0.5 * jnp.tanh(0.5 * h) + 0.5
        term = h * params_ref[9 + j]
        out = term if out is None else out + term
    o_ref[...] = out + params_ref[12]


def _or_mlp_pallas(params, x_slab, br, n_blocks):
    """Run the Pallas kernel on a pre-laid-out (2, rows, 128) f32 slab."""
    rows = n_blocks * br
    assert x_slab.shape == (2, rows, LANE)
    return pl.pallas_call(
        or_mlp_kernel,
        out_shape=jax.ShapeDtypeStruct((rows, LANE), jnp.float32),
        grid_spec=pltpu.PrefetchScalarGridSpec(
            num_scalar_prefetch=1,              # params -> SMEM once, pre-grid
            grid=(n_blocks,),
            in_specs=[
                pl.BlockSpec((2, br, LANE), lambda i, p: (0, i, 0)),
            ],
            out_specs=pl.BlockSpec((br, LANE), lambda i, p: (i, 0)),
        ),
        compiler_params=pltpu.CompilerParams(
            dimension_semantics=("parallel",),
        ),
    )(params, x_slab)


def or_mlp(x, params, *, block_rows=2048, min_pallas_batch=1024,
           force_pallas=False):
    """Forward pass of the OR module. x: (B, 2) f32 -> (B, 1) f32.

    `params` is the packed (13,) vector from pack_params (hoisted out of the
    per-call path).
    """
    assert block_rows % SUBLANE == 0 and block_rows > 0
    B = x.shape[0]
    x = x.astype(jnp.float32)

    if not force_pallas and B < min_pallas_batch:
        # Small-batch fast path: XLA fuses this 3-neuron MLP into one trivial
        # kernel; pallas_call launch + (8,128) padding would dominate here.
        w1 = params[0:6].reshape(2, 3)
        b1 = params[6:9]
        w2 = params[9:12].reshape(3, 1)
        b2 = params[12]
        h = jax.nn.sigmoid(
            jnp.dot(x, w1, precision=jax.lax.Precision.HIGHEST) + b1)
        return jnp.dot(h, w2, precision=jax.lax.Precision.HIGHEST) + b2

    # --- block sizing -------------------------------------------------------
    rows_needed = pl.cdiv(B, LANE)
    rows_rounded = _round_up(rows_needed, SUBLANE)
    n_blocks = pl.cdiv(rows_rounded, block_rows)
    if rows_rounded >= 2 * SUBLANE:
        # >= 2 (and even) blocks so the "parallel" axis can shard across both
        # TensorCores on v7x (no-op on v5e/v6e, where the grid is a loop).
        n_blocks = max(2, n_blocks)
        n_blocks += n_blocks % 2
    # Balance blocks from n_blocks so padding overshoot is < 8 rows per block.
    br = _round_up(pl.cdiv(rows_rounded, n_blocks), SUBLANE)
    rows = n_blocks * br
    bp = rows * LANE

    # Feature-major, lane-dense layout: batch maps onto (sublane, lane).
    # TODO(synk): for peak throughput fuse this transpose/pad into the producer
    # and consume the (rows, 128) slab directly downstream (the round-trip
    # re-reads x and re-writes the output once each).
    xt = jnp.pad(x.T, ((0, 0), (0, bp - B)))        # (2, bp)
    x_slab = xt.reshape(2, rows, LANE)               # (2, rows, 128)

    out_pad = _or_mlp_pallas(params, x_slab, br, n_blocks)

    # Un-pad and restore the PyTorch (B, 1) output shape.
    return out_pad.reshape(bp)[:B].reshape(B, 1)


def init_params(key):
    """Deterministic init matching PyTorch Linear's U(-1/sqrt(fan_in), +)."""
    k1, k2, k3, k4 = jax.random.split(key, 4)
    bound1 = 1.0 / math.sqrt(2.0)  # fc1: in_features = 2
    bound2 = 1.0 / math.sqrt(3.0)  # fc2: in_features = 3
    # Stored as (in, out) — transposed relative to torch's (out, in).
    w1 = jax.random.uniform(k1, (2, 3), jnp.float32, -bound1, bound1)
    b1 = jax.random.uniform(k2, (3,), jnp.float32, -bound1, bound1)
    w2 = jax.random.uniform(k3, (3, 1), jnp.float32, -bound2, bound2)
    b2 = jax.random.uniform(k4, (1,), jnp.float32, -bound2, bound2)
    return w1, b1, w2, b2


def reference(x, w1, b1, w2, b2):
    h = jax.nn.sigmoid(
        jnp.dot(x, w1, precision=jax.lax.Precision.HIGHEST) + b1)
    return jnp.dot(h, w2, precision=jax.lax.Precision.HIGHEST) + b2


if __name__ == "__main__":
    key = jax.random.PRNGKey(0)
    w1, b1, w2, b2 = init_params(key)
    params = pack_params(w1, b1, w2, b2)   # hoisted out of the per-call path

    # The four canonical OR-gate inputs (batch=4, features=2).
    x = jnp.array([[0.0, 0.0],
                   [0.0, 1.0],
                   [1.0, 0.0],
                   [1.0, 1.0]], dtype=jnp.float32)
    ref = reference(x, w1, b1, w2, b2)

    # 1) Force the Pallas path on the tiny input to validate the kernel itself.
    out = or_mlp(x, params, force_pallas=True)
    jax.block_until_ready(out)
    assert out.shape == (4, 1)
    assert jnp.allclose(out, ref, atol=2e-5, rtol=1e-5)

    # 2) Default small-batch fast path (plain XLA, no pallas_call).
    out_fast = or_mlp(x, params)
    jax.block_until_ready(out_fast)
    assert jnp.allclose(out_fast, ref, atol=2e-5, rtol=1e-5)

    # 3) Larger batch exercising the multi-block, megacore-shardable grid:
    #    8192 elems -> 64 rows of 128 lanes -> 2 parallel blocks of (32, 128).
    xb = jax.random.uniform(jax.random.PRNGKey(1), (8192, 2), jnp.float32)
    outb = or_mlp(xb, params)
    jax.block_until_ready(outb)
    refb = reference(xb, w1, b1, w2, b2)
    assert outb.shape == (8192, 1)
    assert jnp.allclose(outb, refb, atol=2e-5, rtol=1e-5)

    print("KERNEL_OK")
</pallas_src>

<mosaic_0001>
module attributes {stable_mosaic.version = 11 : i64} {
  func.func @or_mlp_kernel(%arg0: i32, %arg1: memref<13xf32, #tpu.memory_space<smem>>, %arg2: memref<2x8x128xf32, #tpu.memory_space<vmem>>, %arg3: memref<8x128xf32, #tpu.memory_space<vmem>>) attributes {dimension_semantics = [#tpu.dimension_semantics<parallel>], iteration_bounds = array<i64: 1>, scalar_prefetch = 1 : i64, scratch_operands = 0 : i64, tpu.core_type = #tpu.core_type<tc>, window_params = [{transform_indices = @transform_0, window_bounds = array<i64: 2, 8, 128>}, {transform_indices = @transform_1, window_bounds = array<i64: 8, 128>}]} {
    %c0 = arith.constant 0 : index
    %c0_0 = arith.constant 0 : index
    %c0_1 = arith.constant 0 : index
    %0 = vector.load %arg2[%c0, %c0_0, %c0_1] : memref<2x8x128xf32, #tpu.memory_space<vmem>>, vector<1x8x128xf32>
    %1 = vector.shape_cast %0 : vector<1x8x128xf32> to vector<8x128xf32>
    %c1 = arith.constant 1 : index
    %c0_2 = arith.constant 0 : index
    %c0_3 = arith.constant 0 : index
    %2 = vector.load %arg2[%c1, %c0_2, %c0_3] : memref<2x8x128xf32, #tpu.memory_space<vmem>>, vector<1x8x128xf32>
    %3 = vector.shape_cast %2 : vector<1x8x128xf32> to vector<8x128xf32>
    %c0_4 = arith.constant 0 : index
    %4 = memref.load %arg1[%c0_4] : memref<13xf32, #tpu.memory_space<smem>>
    %5 = vector.broadcast %4 : f32 to vector<8x128xf32>
    %6 = arith.mulf %1, %5 : vector<8x128xf32>
    %c3 = arith.constant 3 : index
    %7 = memref.load %arg1[%c3] : memref<13xf32, #tpu.memory_space<smem>>
    %8 = vector.broadcast %7 : f32 to vector<8x128xf32>
    %9 = arith.mulf %3, %8 : vector<8x128xf32>
    %10 = arith.addf %6, %9 : vector<8x128xf32>
    %c6 = arith.constant 6 : index
    %11 = memref.load %arg1[%c6] : memref<13xf32, #tpu.memory_space<smem>>
    %12 = vector.broadcast %11 : f32 to vector<8x128xf32>
    %13 = arith.addf %10, %12 : vector<8x128xf32>
    %cst = arith.constant 5.000000e-01 : f32
    %14 = vector.broadcast %cst : f32 to vector<8x128xf32>
    %15 = arith.mulf %14, %13 : vector<8x128xf32>
    %16 = math.tanh %15 : vector<8x128xf32>
    %cst_5 = arith.constant 5.000000e-01 : f32
    %17 = vector.broadcast %cst_5 : f32 to vector<8x128xf32>
    %18 = arith.mulf %17, %16 : vector<8x128xf32>
    %cst_6 = arith.constant 5.000000e-01 : f32
    %19 = vector.broadcast %cst_6 : f32 to vector<8x128xf32>
    %20 = arith.addf %18, %19 : vector<8x128xf32>
    %c9 = arith.constant 9 : index
    %21 = memref.load %arg1[%c9] : memref<13xf32, #tpu.memory_space<smem>>
    %22 = vector.broadcast %21 : f32 to vector<8x128xf32>
    %23 = arith.mulf %20, %22 : vector<8x128xf32>
    %c1_7 = arith.constant 1 : index
    %24 = memref.load %arg1[%c1_7] : memref<13xf32, #tpu.memory_space<smem>>
    %25 = vector.broadcast %24 : f32 to vector<8x128xf32>
    %26 = arith.mulf %1, %25 : vector<8x128xf32>
    %c4 = arith.constant 4 : index
    %27 = memref.load %arg1[%c4] : memref<13xf32, #tpu.memory_space<smem>>
    %28 = vector.broadcast %27 : f32 to vector<8x128xf32>
    %29 = arith.mulf %3, %28 : vector<8x128xf32>
    %30 = arith.addf %26, %29 : vector<8x128xf32>
    %c7 = arith.constant 7 : index
    %31 = memref.load %arg1[%c7] : memref<13xf32, #tpu.memory_space<smem>>
    %32 = vector.broadcast %31 : f32 to vector<8x128xf32>
    %33 = arith.addf %30, %32 : vector<8x128xf32>
    %cst_8 = arith.constant 5.000000e-01 : f32
    %34 = vector.broadcast %cst_8 : f32 to vector<8x128xf32>
    %35 = arith.mulf %34, %33 : vector<8x128xf32>
    %36 = math.tanh %35 : vector<8x128xf32>
    %cst_9 = arith.constant 5.000000e-01 : f32
    %37 = vector.broadcast %cst_9 : f32 to vector<8x128xf32>
    %38 = arith.mulf %37, %36 : vector<8x128xf32>
    %cst_10 = arith.constant 5.000000e-01 : f32
    %39 = vector.broadcast %cst_10 : f32 to vector<8x128xf32>
    %40 = arith.addf %38, %39 : vector<8x128xf32>
    %c10 = arith.constant 10 : index
    %41 = memref.load %arg1[%c10] : memref<13xf32, #tpu.memory_space<smem>>
    %42 = vector.broadcast %41 : f32 to vector<8x128xf32>
    %43 = arith.mulf %40, %42 : vector<8x128xf32>
    %44 = arith.addf %23, %43 : vector<8x128xf32>
    %c2 = arith.constant 2 : index
    %45 = memref.load %arg1[%c2] : memref<13xf32, #tpu.memory_space<smem>>
    %46 = vector.broadcast %45 : f32 to vector<8x128xf32>
    %47 = arith.mulf %1, %46 : vector<8x128xf32>
    %c5 = arith.constant 5 : index
    %48 = memref.load %arg1[%c5] : memref<13xf32, #tpu.memory_space<smem>>
    %49 = vector.broadcast %48 : f32 to vector<8x128xf32>
    %50 = arith.mulf %3, %49 : vector<8x128xf32>
    %51 = arith.addf %47, %50 : vector<8x128xf32>
    %c8 = arith.constant 8 : index
    %52 = memref.load %arg1[%c8] : memref<13xf32, #tpu.memory_space<smem>>
    %53 = vector.broadcast %52 : f32 to vector<8x128xf32>
    %54 = arith.addf %51, %53 : vector<8x128xf32>
    %cst_11 = arith.constant 5.000000e-01 : f32
    %55 = vector.broadcast %cst_11 : f32 to vector<8x128xf32>
    %56 = arith.mulf %55, %54 : vector<8x128xf32>
    %57 = math.tanh %56 : vector<8x128xf32>
    %cst_12 = arith.constant 5.000000e-01 : f32
    %58 = vector.broadcast %cst_12 : f32 to vector<8x128xf32>
    %59 = arith.mulf %58, %57 : vector<8x128xf32>
    %cst_13 = arith.constant 5.000000e-01 : f32
    %60 = vector.broadcast %cst_13 : f32 to vector<8x128xf32>
    %61 = arith.addf %59, %60 : vector<8x128xf32>
    %c11 = arith.constant 11 : index
    %62 = memref.load %arg1[%c11] : memref<13xf32, #tpu.memory_space<smem>>
    %63 = vector.broadcast %62 : f32 to vector<8x128xf32>
    %64 = arith.mulf %61, %63 : vector<8x128xf32>
    %65 = arith.addf %44, %64 : vector<8x128xf32>
    %c12 = arith.constant 12 : index
    %66 = memref.load %arg1[%c12] : memref<13xf32, #tpu.memory_space<smem>>
    %67 = vector.broadcast %66 : f32 to vector<8x128xf32>
    %68 = arith.addf %65, %67 : vector<8x128xf32>
    %c0_14 = arith.constant 0 : index
    %c0_15 = arith.constant 0 : index
    %69 = vector.load %arg3[%c0_14, %c0_15] : memref<8x128xf32, #tpu.memory_space<vmem>>, vector<8x128xf32>
    tpu.vector_store %arg3[%c0_14, %c0_15], %68 {strides = array<i32>} : memref<8x128xf32, #tpu.memory_space<vmem>>, vector<8x128xf32>,
    return
  }
  func.func @transform_0(%arg0: i32, %arg1: memref<13xf32, #tpu.memory_space<smem>>) -> (i32, i32, i32) {
    %c0_i32 = arith.constant 0 : i32
    %c0_i32_0 = arith.constant 0 : i32
    %c0_i32_1 = arith.constant 0 : i32
    return %c0_i32, %arg0, %c0_i32_0 : i32, i32, i32
  }
  func.func @transform_1(%arg0: i32, %arg1: memref<13xf32, #tpu.memory_space<smem>>) -> (i32, i32) {
    %c0_i32 = arith.constant 0 : i32
    %c0_i32_0 = arith.constant 0 : i32
    return %arg0, %c0_i32 : i32, i32
  }
}

</mosaic_0001>

<llo_original>
// kernel: tpu_custom_call.1
$region0: #{tpu_custom_call.1}
  #allocation0 [shape = 'u32[]', space=smem, size = 0x4, offset = 0x4, fixed_abs, tag = 'smem constant byte address 0x4 - core index']
  #allocation1 [shape = 'u32[144,128]{1,0:T(1,128)}', space=vmem, size = 0x12000, scoped, tag = 'internal scratch']
  #allocation2 [shape = 's32[1]{0}', space=sflag, size = 0x4, scoped, tag = 'scoped memory for tpu_custom_call.1']
  #allocation3 [shape = 'u8[512]{0}', space=smem, size = 0x200, scoped, tag = 'prefetched SMEM operand 0']
  %s0 = inlined_call_operand.hbm [shape: f32[13], index: 0, kind: input, shape index: {}]
  %s1 = inlined_call_operand.hbm [shape: f32[2,8,128], index: 1, kind: input, shape index: {}]
  %s2 = inlined_call_operand.hbm [shape: f32[8,128], index: 2, kind: output, shape index: {}]
  %s3 = sld [smem:[#allocation0]]
  $region18: #{tpu_custom_call.1} parent=0
    _
  %s5 = ssub.s32 1, %s3
  %s6 = scalar_select 0, %s5, %s3
  %8 = dma.hbm_to_smem %s0, 16, [#allocation3], [#allocation2]
  %9 = dma.done [#allocation2], 16
  %10 = sfence
  $region1: #{tpu_custom_call.1} parent=0
    #allocation4 [shape = 'u8[8192]{0}', space=vmem, size = 0x2000, scoped, tag = 'input window, operand 1, single buffered']
    #allocation5 [shape = 's32[1]{0}', space=sflag, size = 0x4, scoped, tag = 'scoped memory for tpu_custom_call.1']
    #allocation6 [shape = 's32[1]{0}', space=sflag, size = 0x4, scoped, tag = 'scoped memory for tpu_custom_call.1']
    #allocation7 [shape = 'u8[4096]{0}', space=vmem, size = 0x1000, scoped, tag = 'output window, operand 0, single buffered']
    %11 = vsyncpa [#allocation5], 0
    %12 = vsyncpa [#allocation6], 0
    // Predicated region
    $region2: #{tpu_custom_call.1} parent=1 // pred_check
      _
    $region3: #{tpu_custom_call.1} parent=1 // pred_check_branch
      %14 = sbr.rel (0) target = $region5
    $region4: #{tpu_custom_call.1} parent=1 // pred_region
      %s16 = ssub.s32 256, 256
      %17 = vsyncadd [#allocation5], %s16
      %s18 = sshll.u32 [#allocation4], 4
      %s19 = int_to_ptr.vmem [resolvable:$true] %s18
      %24 = dma.hbm_to_vmem [thread:$0]  %s1, 256, %s19, [#allocation5], 128, 128, 8
    $region5: #{tpu_custom_call.1} parent=1 // pred_fallthru
      _
    // Predicated region
    $region6: #{tpu_custom_call.1} parent=1 // pred_check
      _
    $region7: #{tpu_custom_call.1} parent=1 // pred_check_branch
      %26 = sbr.rel (0) target = $region9
    $region8: #{tpu_custom_call.1} parent=1 // pred_region
      %27 = dma.done [#allocation5], 256
    $region9: #{tpu_custom_call.1} parent=1 // pred_fallthru
      _
    %v28 = vld [vmem:[#allocation4] sm:$0xff]
    %s29 = scalar_lea.vmem [#allocation4], 8
    %v30 = vld [vmem:[%s29] sm:$0xff]
    %s31 = sld [smem:[#allocation3]]
    %v32 = vstv %s31
    %v33 = vmul.f32 %v28, %v32
    %s34 = sld [smem:[#allocation3 + $0x3]]
    %v35 = vstv %s34
    %v36 = vmul.f32 %v30, %v35
    %v37 = vadd.f32 %v33, %v36
    %s38 = sld [smem:[#allocation3 + $0x6]]
    %v39 = vstv %s38
    %v40 = vadd.f32 %v37, %v39
    %v41 = vmul.f32 %v40, 0.5
    %v42 = vtanh.pop %v41
    %v43 = vmul.f32 %v42, 0.5
    %v44 = vadd.f32 %v43, 0.5
    %s45 = sld [smem:[#allocation3 + $0x9]]
    %v46 = vstv %s45
    %v47 = vmul.f32 %v44, %v46
    %s48 = sld [smem:[#allocation3 + $0x1]]
    %v49 = vstv %s48
    %v50 = vmul.f32 %v28, %v49
    %s51 = sld [smem:[#allocation3 + $0x4]]
    %v52 = vstv %s51
    %v53 = vmul.f32 %v30, %v52
    %v54 = vadd.f32 %v50, %v53
    %s55 = sld [smem:[#allocation3 + $0x7]]
    %v56 = vstv %s55
    %v57 = vadd.f32 %v54, %v56
    %v58 = vmul.f32 %v57, 0.5
    %v59 = vtanh.pop %v58
    %v60 = vmul.f32 %v59, 0.5
    %v61 = vadd.f32 %v60, 0.5
    %s62 = sld [smem:[#allocation3 + $0xa]]
    %v63 = vstv %s62
    %v64 = vmul.f32 %v61, %v63
    %v65 = vadd.f32 %v47, %v64
    %s66 = sld [smem:[#allocation3 + $0x2]]
    %v67 = vstv %s66
    %v68 = vmul.f32 %v28, %v67
    %s69 = sld [smem:[#allocation3 + $0x5]]
    %v70 = vstv %s69
    %v71 = vmul.f32 %v30, %v70
    %v72 = vadd.f32 %v68, %v71
    %s73 = sld [smem:[#allocation3 + $0x8]]
    %v74 = vstv %s73
    %v75 = vadd.f32 %v72, %v74
    %v76 = vmul.f32 %v75, 0.5
    %v77 = vtanh.pop %v76
    %v78 = vmul.f32 %v77, 0.5
    %v79 = vadd.f32 %v78, 0.5
    %s80 = sld [smem:[#allocation3 + $0xb]]
    %v81 = vstv %s80
    %v82 = vmul.f32 %v79, %v81
    %v83 = vadd.f32 %v65, %v82
    %s84 = sld [smem:[#allocation3 + $0xc]]
    %v85 = vstv %s84
    %v86 = vadd.f32 %v83, %v85
    %87 = vst [vmem:[#allocation7] sm:$0xff] %v86
    // Predicated region
    $region10: #{tpu_custom_call.1} parent=1 // pred_check
      _
    $region11: #{tpu_custom_call.1} parent=1 // pred_check_branch
      %89 = sbr.rel (0) target = $region13
    $region12: #{tpu_custom_call.1} parent=1 // pred_region
      %s91 = ssub.s32 128, 128
      %92 = vsyncadd [#allocation6], %s91
      %s94 = sshll.u32 [#allocation7], 4
      %s95 = int_to_ptr.vmem [resolvable:$true] %s94
      %97 = dma.vmem_to_hbm [thread:$0]  %s95, 128, %s2, [#allocation6]
    $region13: #{tpu_custom_call.1} parent=1 // pred_fallthru
      _
    // Predicated region
    $region14: #{tpu_custom_call.1} parent=1 // pred_check
      _
    $region15: #{tpu_custom_call.1} parent=1 // pred_check_branch
      %99 = sbr.rel (0) target = $region17
    $region16: #{tpu_custom_call.1} parent=1 // pred_region
      %100 = dma.done [#allocation6], 128
    $region17: #{tpu_custom_call.1} parent=1 // pred_fallthru
      _
    %101 = vsyncpa [#allocation5], 1
    %102 = vsyncpa [#allocation6], 1

</llo_original>
